<compile_context>
chip_gen: v6e
topology: v6e:2x2x1
jax: 0.10.0
libtpu: 0.0.40
codegen_flags: <defaults>
</compile_context>

<pallas_src>
import jax
import jax.numpy as jnp
from jax.experimental import pallas as pl
from jax.experimental.pallas import tpu as pltpu


# ---------------------------------------------------------------------------
# Pass 1: ResBlock chain per medusa head.
#   grid = (H, L, D // td); the (D, D) layer weight is streamed in (D, td) column tiles.
# ---------------------------------------------------------------------------
def _resblock_kernel(hs_ref, w_ref, xout_ref, x_sc, y_sc):
    # hs_ref:   (Sp, D)  bf16 hidden states (constant block index -> resident)
    # w_ref:    (D, td)  bf16 column tile of W_res[h, l] (already [in, out])
    # xout_ref: (Sp, D)  bf16 output activations for head h
    # x_sc:     (Sp, D)  f32 running activations for head h
    # y_sc:     (Sp, D)  f32 pre-activation accumulator for the current layer
    l = pl.program_id(1)
    c = pl.program_id(2)
    n_l = pl.num_programs(1)
    n_c = pl.num_programs(2)
    td = w_ref.shape[-1]

    @pl.when(jnp.logical_and(l == 0, c == 0))
    def _init_head():
        x_sc[...] = hs_ref[...].astype(jnp.float32)

    # y[:, c*td:(c+1)*td] = x @ W_l[:, c*td:(c+1)*td]   (bf16 MXU, f32 accumulation)
    start = pl.multiple_of(c * td, 128)
    y_sc[:, pl.ds(start, td)] = jnp.dot(
        x_sc[...].astype(jnp.bfloat16), w_ref[...],
        preferred_element_type=jnp.float32)

    @pl.when(c == n_c - 1)
    def _finish_layer():
        y = y_sc[...]
        x_sc[...] = x_sc[...] + y * jax.nn.sigmoid(y)  # SiLU residual in f32

    # The output block index only changes per head, so only the final (l, c) write of a
    # head is DMA'd back; intermediate writes are cheap VMEM overwrites.
    xout_ref[...] = x_sc[...].astype(xout_ref.dtype)


# ---------------------------------------------------------------------------
# Pass 2: lm-head streaming matmul.  grid = (G, V // tv), both axes independent.
# ---------------------------------------------------------------------------
def _lm_head_kernel(x_ref, w_ref, out_ref):
    # x_ref: (Sp, D) bf16 per-head activations, w_ref: (D, tv) bf16, out_ref: (Sp, tv) f32
    out_ref[...] = jnp.dot(x_ref[...], w_ref[...],
                           preferred_element_type=jnp.float32)


def _lm_head_kernel_q(x_ref, w_ref, scale_ref, out_ref):
    # int8 weight-only path: dequantize in VMEM (HBM stream already halved), scale in f32.
    w = w_ref[...].astype(jnp.float32).astype(jnp.bfloat16)
    acc = jnp.dot(x_ref[...], w, preferred_element_type=jnp.float32)
    out_ref[...] = acc * scale_ref[...]  # (1, tv) per-vocab-column scales


# ---------------------------------------------------------------------------
# One-time (model-init) weight packing.
# ---------------------------------------------------------------------------
def pack_medusa_weights(base_lm_w, res_w, med_lm_w, *, lm_dtype="bf16"):
    """Transpose PyTorch Linear [out, in] -> [in, out], pad V to a lane multiple, cast/quantize.

    Args:
      base_lm_w: [V, D]        base lm_head weight (PyTorch layout)
      res_w:     [H, L, D, D]  ResBlock weights (PyTorch layout, bias=False)
      med_lm_w:  [H, V, D]     medusa lm_head weights (PyTorch layout)
      lm_dtype:  "bf16" or "int8" (weight-only quant, per-vocab-column scales)
    Returns:
      res_w_packed [H, L, D, D] bf16 ([in,out] per layer),
      lm_w_packed  [G, D, Vpad] bf16 or int8,
      lm_scale     [G, 1, Vpad] f32 or None,
      vocab_size   original V (for un-padding the logits)
    """
    lm_w = jnp.concatenate(
        [base_lm_w.T[None], jnp.transpose(med_lm_w, (0, 2, 1))], axis=0
    ).astype(jnp.float32)                                   # [G, D, V]
    V = lm_w.shape[-1]
    v_pad = (-V) % 128
    if v_pad:
        lm_w = jnp.pad(lm_w, ((0, 0), (0, 0), (0, v_pad)))
    res_w_packed = jnp.transpose(res_w, (0, 1, 3, 2)).astype(jnp.bfloat16)

    if lm_dtype == "int8":
        amax = jnp.max(jnp.abs(lm_w), axis=1, keepdims=True)      # [G, 1, Vpad]
        scale = jnp.maximum(amax, 1e-8) / 127.0
        q = jnp.clip(jnp.round(lm_w / scale), -127, 127).astype(jnp.int8)
        return res_w_packed, q, scale.astype(jnp.float32), V
    return res_w_packed, lm_w.astype(jnp.bfloat16), None, V


# ---------------------------------------------------------------------------
# VMEM-aware tile selection.
# ---------------------------------------------------------------------------
def _vmem_budget():
    try:
        cap = pltpu.get_tpu_info().vmem_capacity_bytes
    except Exception:
        cap = 64 * 1024 * 1024  # conservative (v7x-sized) fallback
    vmem_limit = min(100 * 1024 * 1024, int(cap * 0.85))
    budget = vmem_limit - 8 * 1024 * 1024  # headroom for activations / outputs / misc
    return vmem_limit, max(budget, 8 * 1024 * 1024)


def _pick_tv(vp, d, sp, w_itemsize, budget):
    for cand in (4096, 2048, 1024, 512, 256, 128):
        if vp % cand:
            continue
        need = 3 * d * cand * w_itemsize + 2 * sp * cand * 4 + 2 * cand * 4
        if need <= budget:
            return cand
    for cand in (128, 256, 512, 1024, 2048, 4096):
        if vp % cand == 0:
            return cand
    return vp


# ---------------------------------------------------------------------------
# Forward wrapper.
# ---------------------------------------------------------------------------
def medusa_lm_head(hidden_states, res_w_packed, lm_w_packed, lm_scale=None, *,
                   vocab_size=None, tv=None, td=None):
    """Compute stacked Medusa logits.

    Returns (logits [H+1, S, V] f32, base_logits [S, V] f32).
    """
    S, D = hidden_states.shape
    H, L, _, _ = res_w_packed.shape
    G, _, Vp = lm_w_packed.shape
    assert G == H + 1
    V = Vp if vocab_size is None else vocab_size
    quantized = lm_scale is not None

    # Pad S to a sublane multiple so stores stay unmasked (decode-time S = 1..4).
    s_pad = (-S) % 8
    hs = jnp.pad(hidden_states, ((0, s_pad), (0, 0))) if s_pad else hidden_states
    Sp = S + s_pad
    hs_bf16 = hs.astype(jnp.bfloat16)

    vmem_limit, budget = _vmem_budget()

    # ---------------- Pass 1: ResBlock activations (tiny) ----------------
    if td is None:
        for cand in (1024, 512, 256, 128):
            if D % cand == 0:
                td = cand
                break
        else:
            td = D
    assert D % td == 0
    nc = D // td

    res_cost = pl.CostEstimate(
        flops=2 * H * L * Sp * D * D,
        transcendentals=H * L * Sp * D,
        bytes_accessed=H * L * D * D * 2 + Sp * D * 2 + H * Sp * D * 2)

    x_med = pl.pallas_call(
        _resblock_kernel,
        out_shape=jax.ShapeDtypeStruct((H, Sp, D), jnp.bfloat16),
        grid_spec=pltpu.PrefetchScalarGridSpec(
            num_scalar_prefetch=0,
            grid=(H, L, nc),
            in_specs=[
                pl.BlockSpec((Sp, D), lambda h, l, c: (0, 0)),
                pl.BlockSpec((pl.Squeezed(), pl.Squeezed(), D, td),
                             lambda h, l, c: (h, l, 0, c)),
            ],
            out_specs=pl.BlockSpec((pl.Squeezed(), Sp, D), lambda h, l, c: (h, 0, 0)),
            scratch_shapes=[pltpu.VMEM((Sp, D), jnp.float32),
                            pltpu.VMEM((Sp, D), jnp.float32)],
        ),
        compiler_params=pltpu.CompilerParams(
            dimension_semantics=("parallel", "arbitrary", "arbitrary"),
            vmem_limit_bytes=vmem_limit),
        cost_estimate=res_cost,
    )(hs_bf16, res_w_packed)

    # Head 0 (base lm_head) acts on the raw hidden states; heads 1..H on ResBlock outputs.
    # This concat is a few hundred KB (G*Sp*D bf16) — negligible next to the lm_w stream.
    x_all = jnp.concatenate([hs_bf16[None], x_med], axis=0)  # [G, Sp, D] bf16

    # ---------------- Pass 2: lm-head stream (HBM-bandwidth bound) ----------------
    w_itemsize = jnp.dtype(lm_w_packed.dtype).itemsize
    if tv is None:
        tv = _pick_tv(Vp, D, Sp, w_itemsize, budget)
    assert Vp % tv == 0, f"vocab tile {tv} must divide padded V={Vp}"

    lm_cost = pl.CostEstimate(
        flops=2 * G * Sp * D * Vp,
        transcendentals=0,
        bytes_accessed=int(G * D * Vp * w_itemsize + G * Sp * Vp * 4 + G * Sp * D * 2))

    kernel = _lm_head_kernel_q if quantized else _lm_head_kernel

    def run(deep_buffer):
        if deep_buffer:
            lm_spec = pl.BlockSpec((pl.Squeezed(), D, tv), lambda g, j: (g, 0, j),
                                   pipeline_mode=pl.Buffered(3))
        else:
            lm_spec = pl.BlockSpec((pl.Squeezed(), D, tv), lambda g, j: (g, 0, j))
        in_specs = [pl.BlockSpec((pl.Squeezed(), Sp, D), lambda g, j: (g, 0, 0)), lm_spec]
        inputs = [x_all, lm_w_packed]
        if quantized:
            in_specs.append(pl.BlockSpec((pl.Squeezed(), 1, tv), lambda g, j: (g, 0, j)))
            inputs.append(lm_scale)
        return pl.pallas_call(
            kernel,
            out_shape=jax.ShapeDtypeStruct((G, Sp, Vp), jnp.float32),
            grid_spec=pltpu.PrefetchScalarGridSpec(
                num_scalar_prefetch=0,
                grid=(G, Vp // tv),
                in_specs=in_specs,
                out_specs=pl.BlockSpec((pl.Squeezed(), Sp, tv), lambda g, j: (g, 0, j)),
            ),
            compiler_params=pltpu.CompilerParams(
                dimension_semantics=("parallel", "parallel"),
                vmem_limit_bytes=vmem_limit),
            cost_estimate=lm_cost,
        )(*inputs)

    try:
        logits = run(True)
    except Exception:
        # TODO(synk): pipeline_mode=pl.Buffered(3) not accepted by this Pallas build;
        # fall back to the default double-buffered pipeline.
        logits = run(False)

    if s_pad or Vp != V:
        logits = logits[:, :S, :V]
    return logits, logits[0]


# ---------------------------------------------------------------------------
# Pure-f32 reference matching MedusaLMHead.forward semantics.
# ---------------------------------------------------------------------------
def _reference(hidden_states, base_lm_w, res_w, med_lm_w):
    base = hidden_states @ base_lm_w.T
    outs = [base]
    H, L = res_w.shape[0], res_w.shape[1]
    for h in range(H):
        x = hidden_states
        for l in range(L):
            y = x @ res_w[h, l].T
            x = x + y * jax.nn.sigmoid(y)
        outs.append(x @ med_lm_w[h].T)
    return jnp.stack(outs, axis=0), base


if __name__ == "__main__":
    # Small, MXU/lane-friendly shapes consistent with the module
    # (hidden_size=D, vocab_size=V, num_heads=H, num_hidden_layers=L).
    S, D, V = 8, 256, 512
    H, L = 3, 2

    key = jax.random.PRNGKey(0)
    k0, k1, k2, k3 = jax.random.split(key, 4)
    hidden_states = jax.random.normal(k0, (S, D), dtype=jnp.float32)
    base_lm_w = jax.random.normal(k1, (V, D), dtype=jnp.float32) * 0.02
    res_w = jax.random.normal(k2, (H, L, D, D), dtype=jnp.float32) * 0.02
    med_lm_w = jax.random.normal(k3, (H, V, D), dtype=jnp.float32) * 0.02

    ref_logits, ref_base = _reference(hidden_states, base_lm_w, res_w, med_lm_w)

    # ---- bf16 weight path ----
    res_p, lm_p, lm_s, vsz = pack_medusa_weights(base_lm_w, res_w, med_lm_w)
    logits, base_logits = jax.block_until_ready(
        medusa_lm_head(hidden_states, res_p, lm_p, lm_s, vocab_size=vsz, tv=256, td=128))
    assert logits.shape == (H + 1, S, V)
    assert base_logits.shape == (S, V)
    assert jnp.allclose(logits, ref_logits, atol=4e-2, rtol=4e-2), float(
        jnp.max(jnp.abs(logits - ref_logits)))
    assert jnp.allclose(base_logits, ref_base, atol=4e-2, rtol=4e-2)

    # ---- int8 weight-only path (halves the dominant lm_w HBM stream) ----
    res_p8, lm_p8, lm_s8, vsz8 = pack_medusa_weights(
        base_lm_w, res_w, med_lm_w, lm_dtype="int8")
    logits8, _ = jax.block_until_ready(
        medusa_lm_head(hidden_states, res_p8, lm_p8, lm_s8, vocab_size=vsz8, tv=256, td=128))
    assert jnp.allclose(logits8, ref_logits, atol=8e-2, rtol=8e-2), float(
        jnp.max(jnp.abs(logits8 - ref_logits)))

    print("KERNEL_OK")
</pallas_src>

<mosaic_0001>
module attributes {stable_mosaic.version = 11 : i64} {
  func.func @_resblock_kernel(%arg0: i32, %arg1: i32, %arg2: i32, %arg3: memref<8x256xbf16, #tpu.memory_space<vmem>>, %arg4: memref<1x1x256x128xbf16, #tpu.memory_space<vmem>>, %arg5: memref<1x8x256xbf16, #tpu.memory_space<vmem>>, %arg6: memref<8x256xf32, #tpu.memory_space<vmem>>, %arg7: memref<8x256xf32, #tpu.memory_space<vmem>>) attributes {dimension_semantics = [#tpu.dimension_semantics<parallel>, #tpu.dimension_semantics<arbitrary>, #tpu.dimension_semantics<arbitrary>], iteration_bounds = array<i64: 3, 2, 2>, scalar_prefetch = 0 : i64, scratch_operands = 2 : i64, tpu.core_type = #tpu.core_type<tc>, window_params = [{pipeline_mode = #tpu.pipeline_mode<synchronous>, transform_indices = @transform_0, window_bounds = array<i64: 8, 256>}, {transform_indices = @transform_1, window_bounds = array<i64: 1, 1, 256, 128>}, {transform_indices = @transform_2, window_bounds = array<i64: 1, 8, 256>}]} {
    %c0_i32 = arith.constant 0 : i32
    %0 = arith.cmpi eq, %arg1, %c0_i32 : i32
    %c0_i32_0 = arith.constant 0 : i32
    %1 = arith.cmpi eq, %arg2, %c0_i32_0 : i32
    %2 = arith.andi %0, %1 : i1
    %3 = arith.extui %2 : i1 to i32
    %c0_i32_1 = arith.constant 0 : i32
    %4 = arith.cmpi ne, %3, %c0_i32_1 : i32
    scf.if %4 {
      %c0_14 = arith.constant 0 : index
      %c0_15 = arith.constant 0 : index
      %22 = vector.load %arg3[%c0_14, %c0_15] : memref<8x256xbf16, #tpu.memory_space<vmem>>, vector<8x256xbf16>
      %23 = arith.extf %22 : vector<8x256xbf16> to vector<8x256xf32>
      %c0_16 = arith.constant 0 : index
      %c0_17 = arith.constant 0 : index
      %24 = vector.load %arg6[%c0_16, %c0_17] : memref<8x256xf32, #tpu.memory_space<vmem>>, vector<8x256xf32>
      tpu.vector_store %arg6[%c0_16, %c0_17], %23 {strides = array<i32>} : memref<8x256xf32, #tpu.memory_space<vmem>>, vector<8x256xf32>,
    } else {
    }
    %c128_i32 = arith.constant 128 : i32
    %5 = arith.muli %arg2, %c128_i32 : i32
    %6 = tpu.assume_multiple %5, 128 : i32
    %c0 = arith.constant 0 : index
    %c0_2 = arith.constant 0 : index
    %7 = vector.load %arg6[%c0, %c0_2] : memref<8x256xf32, #tpu.memory_space<vmem>>, vector<8x256xf32>
    %8 = arith.truncf %7 : vector<8x256xf32> to vector<8x256xbf16>
    %c0_3 = arith.constant 0 : index
    %c0_4 = arith.constant 0 : index
    %c0_5 = arith.constant 0 : index
    %c0_6 = arith.constant 0 : index
    %9 = vector.load %arg4[%c0_3, %c0_4, %c0_5, %c0_6] : memref<1x1x256x128xbf16, #tpu.memory_space<vmem>>, vector<1x1x256x128xbf16>
    %10 = vector.shape_cast %9 : vector<1x1x256x128xbf16> to vector<256x128xbf16>
    %cst = arith.constant dense<0.000000e+00> : vector<8x128xf32>
    %11 = tpu.matmul %8, %10, %cst {dimension_numbers = #tpu.dot_dimension_numbers<[1], [0], [0], [1], [0, 0, 1, 1], [], []>} : vector<8x256xbf16>, vector<256x128xbf16>, vector<8x128xf32> -> vector<8x128xf32>
    %c0_7 = arith.constant 0 : index
    %12 = arith.index_cast %6 : i32 to index
    %13 = vector.load %arg7[%c0_7, %12] : memref<8x256xf32, #tpu.memory_space<vmem>>, vector<8x128xf32>
    tpu.vector_store %arg7[%c0_7, %12], %11 {strides = array<i32>} : memref<8x256xf32, #tpu.memory_space<vmem>>, vector<8x128xf32>,
    %c1_i32 = arith.constant 1 : i32
    %14 = arith.cmpi eq, %arg2, %c1_i32 : i32
    %15 = arith.extui %14 : i1 to i32
    %c0_i32_8 = arith.constant 0 : i32
    %16 = arith.cmpi ne, %15, %c0_i32_8 : i32
    scf.if %16 {
      %c0_14 = arith.constant 0 : index
      %c0_15 = arith.constant 0 : index
      %22 = vector.load %arg7[%c0_14, %c0_15] : memref<8x256xf32, #tpu.memory_space<vmem>>, vector<8x256xf32>
      %c0_16 = arith.constant 0 : index
      %c0_17 = arith.constant 0 : index
      %23 = vector.load %arg6[%c0_16, %c0_17] : memref<8x256xf32, #tpu.memory_space<vmem>>, vector<8x256xf32>
      %24 = arith.negf %22 : vector<8x256xf32>
      %25 = math.exp %24 : vector<8x256xf32>
      %cst_18 = arith.constant 1.000000e+00 : f32
      %26 = vector.broadcast %cst_18 : f32 to vector<8x256xf32>
      %27 = arith.addf %26, %25 : vector<8x256xf32>
      %28 = arith.divf %26, %27 : vector<8x256xf32>
      %29 = arith.mulf %22, %28 : vector<8x256xf32>
      %30 = arith.addf %23, %29 : vector<8x256xf32>
      %c0_19 = arith.constant 0 : index
      %c0_20 = arith.constant 0 : index
      %31 = vector.load %arg6[%c0_19, %c0_20] : memref<8x256xf32, #tpu.memory_space<vmem>>, vector<8x256xf32>
      tpu.vector_store %arg6[%c0_19, %c0_20], %30 {strides = array<i32>} : memref<8x256xf32, #tpu.memory_space<vmem>>, vector<8x256xf32>,
    } else {
    }
    %c0_9 = arith.constant 0 : index
    %c0_10 = arith.constant 0 : index
    %17 = vector.load %arg6[%c0_9, %c0_10] : memref<8x256xf32, #tpu.memory_space<vmem>>, vector<8x256xf32>
    %18 = arith.truncf %17 : vector<8x256xf32> to vector<8x256xbf16>
    %c0_11 = arith.constant 0 : index
    %c0_12 = arith.constant 0 : index
    %c0_13 = arith.constant 0 : index
    %19 = vector.load %arg5[%c0_11, %c0_12, %c0_13] : memref<1x8x256xbf16, #tpu.memory_space<vmem>>, vector<1x8x256xbf16>
    %20 = vector.shape_cast %19 : vector<1x8x256xbf16> to vector<8x256xbf16>
    %21 = vector.shape_cast %18 : vector<8x256xbf16> to vector<1x8x256xbf16>
    tpu.vector_store %arg5[%c0_11, %c0_12, %c0_13], %21 {strides = array<i32>} : memref<1x8x256xbf16, #tpu.memory_space<vmem>>, vector<1x8x256xbf16>,
    return
  }
  func.func @transform_0(%arg0: i32, %arg1: i32, %arg2: i32) -> (i32, i32) {
    %c0_i32 = arith.constant 0 : i32
    %c0_i32_0 = arith.constant 0 : i32
    %c0_i32_1 = arith.constant 0 : i32
    return %c0_i32, %c0_i32_0 : i32, i32
  }
  func.func @transform_1(%arg0: i32, %arg1: i32, %arg2: i32) -> (i32, i32, i32, i32) {
    %c0_i32 = arith.constant 0 : i32
    %c0_i32_0 = arith.constant 0 : i32
    return %arg0, %arg1, %c0_i32, %arg2 : i32, i32, i32, i32
  }
  func.func @transform_2(%arg0: i32, %arg1: i32, %arg2: i32) -> (i32, i32, i32) {
    %c0_i32 = arith.constant 0 : i32
    %c0_i32_0 = arith.constant 0 : i32
    %c0_i32_1 = arith.constant 0 : i32
    return %arg0, %c0_i32, %c0_i32_0 : i32, i32, i32
  }
}

</mosaic_0001>

<llo_original>
// kernel: tpu_custom_call.1
$region0: #{tpu_custom_call.1}
  #allocation0 [shape = 'u32[]', space=smem, size = 0x4, offset = 0x4, fixed_abs, tag = 'smem constant byte address 0x4 - core index']
  #allocation1 [shape = 'u32[144,128]{1,0:T(1,128)}', space=vmem, size = 0x12000, scoped, tag = 'internal scratch']
  #allocation2 [shape = 'f32[8,256]{1,0:T(8,128)}', space=vmem, size = 0x2000, scoped, tag = 'scratch operand']
  #allocation3 [shape = 'f32[8,256]{1,0:T(8,128)}', space=vmem, size = 0x2000, scoped, tag = 'scratch operand']
  %s0 = inlined_call_operand.hbm [shape: bf16[8,256], index: 0, kind: input, shape index: {}]
  %s1 = inlined_call_operand.hbm [shape: bf16[3,2,256,256], index: 1, kind: input, shape index: {}]
  %s2 = inlined_call_operand.hbm [shape: bf16[3,8,256], index: 2, kind: output, shape index: {}]
  %s3 = sld [smem:[#allocation0]]
  $region57: #{tpu_custom_call.1} parent=0
    _
  %s5 = ssub.s32 1, %s3
  %s6 = scalar_select 0, %s5, %s3
  $region1: #{tpu_custom_call.1} parent=0
    #allocation4 [shape = 'u8[4096]{0}', space=vmem, size = 0x1000, scoped, tag = 'input window, operand 0, single buffered']
    #allocation5 [shape = 's32[2]{0}', space=sflag, size = 0x8, scoped, tag = 'scoped memory for tpu_custom_call.1']
    #allocation6 [shape = 's32[2]{0}', space=sflag, size = 0x8, scoped, tag = 'scoped memory for tpu_custom_call.1']
    #allocation7 [shape = 'u8[131072]{0}', space=vmem, size = 0x20000, scoped, tag = 'input window, operand 1']
    #allocation8 [shape = 's32[2]{0}', space=sflag, size = 0x8, scoped, tag = 'scoped memory for tpu_custom_call.1']
    #allocation9 [shape = 'u8[8192]{0}', space=vmem, size = 0x2000, scoped, tag = 'output window, operand 0']
    %7 = vsyncpa [#allocation5], 0
    %8 = vsyncpa [#allocation8], 0
    %s9 = scalar_lea.sflag [#allocation8], 1
    %10 = vsyncpa %s9, 0
    %11 = vsyncpa [#allocation6], 0
    %s12 = scalar_lea.sflag [#allocation6], 1
    %13 = vsyncpa %s12, 0
    loop: start=0, step=1, limit=14
    $region2: #{tpu_custom_call.1} parent=1 // loop_pre_header
      _
    $region3: #{tpu_custom_call.1} parent=1 // loop_header
      %s15 = sphi 0, %s19
      %p16 = scmp.ge.s32.totalorder %s15, 14
      %s22 = sphi 0, %s41
      %s23 = sphi 0, %s37
      %s24 = sphi 0, %s33
      %s25 = sphi 0, %s22
      %s26 = sphi 0, %s23
      %s27 = sphi 0, %s24
      %s28 = sphi 0, %s25
      %s29 = sphi 0, %s26
      %s30 = sphi 0, %s27
      %s42 = sphi 0, %s42
      %s44 = sphi 0, %s42
      %s45 = sphi 0, %s44
      %s59 = sphi 0, %s45
      %s69 = sphi 0, %s71
      %s72 = sphi 0, %s69
      %s73 = sphi 0, %s72
      %s89 = sphi 0, %s73
      %s95 = sphi 0, %s97
      %s98 = sphi 0, %s95
      %s99 = sphi 0, %s98
      %s115 = sphi 0, %s99
    $region4: #{tpu_custom_call.1} parent=1 // loop_header_branch
      %18 = sbr.rel (%p16) target = $region8
    $region5: #{tpu_custom_call.1} parent=1 // loop_body
      %s20 = ssub.s32 %s15, 1
      %s21 = ssub.s32 %s15, 2
      %s31 = sadd.s32 1, %s24
      %p32 = scmp.ge.s32.totalorder %s31, 2
      %s33 = scalar_select %p32, 0, %s31
      %s34 = sadd.s32 1, %s23
      %s35 = scalar_select %p32, %s34, %s23
      %p36 = scmp.ge.s32.totalorder %s35, 2
      %s37 = scalar_select %p36, 0, %s35
      %s38 = sadd.s32 1, %s22
      %s39 = scalar_select %p36, %s38, %s22
      %p40 = scmp.ge.s32.totalorder %s39, 3
      %s41 = scalar_select %p40, 0, %s39
      %s43 = sadd.s32 %s42, 1
      %p46 = scmp.eq.s32.totalorder %s15, 11
      %p47 = scmp.ne.s32.totalorder %s42, %s44
      %p48 = scmp.eq.s32.totalorder %s15, 0
      %p49 = por %p47, %p48
      %p50 = scmp.ne.s32.totalorder %s42, %s44
      %p51 = scmp.eq.s32.totalorder %s20, 11
      %p52 = por %p50, %p51
      %p53 = scmp.ne.s32.totalorder %s44, %s45
      %p54 = scmp.eq.s32.totalorder %s20, 0
      %p55 = por %p53, %p54
      %p56 = scmp.ne.s32.totalorder %s44, %s45
      %p57 = scmp.eq.s32.totalorder %s21, 11
      %p58 = por %p56, %p57
      %p60 = scmp.ne.s32.totalorder %s45, %s59
      %p61 = scmp.eq.s32.totalorder %s21, 0
      %p62 = por %p60, %p61
      %s63 = ssub.s32 %s22, %s41
      %s64 = ssub.s32 %s23, %s37
      %s65 = sor.u32 %s63, %s64
      %s66 = ssub.s32 %s24, %s33
      %s67 = sor.u32 %s65, %s66
      %p68 = scmp.eq.s32.totalorder %s67, 0
      %s70 = sadd.s32 %s69, 1
      %s71 = scalar_select %p68, %s69, %s70
      %p74 = pneg %p68
      %p75 = scmp.eq.s32.totalorder %s15, 11
      %p76 = por %p74, %p75
      %p77 = scmp.ne.s32.totalorder %s69, %s72
      %p78 = scmp.eq.s32.totalorder %s15, 0
      %p79 = por %p77, %p78
      %p80 = scmp.ne.s32.totalorder %s69, %s72
      %p81 = scmp.eq.s32.totalorder %s20, 11
      %p82 = por %p80, %p81
      %p83 = scmp.ne.s32.totalorder %s72, %s73
      %p84 = scmp.eq.s32.totalorder %s20, 0
      %p85 = por %p83, %p84
      %p86 = scmp.ne.s32.totalorder %s72, %s73
      %p87 = scmp.eq.s32.totalorder %s21, 11
      %p88 = por %p86, %p87
      %p90 = scmp.ne.s32.totalorder %s73, %s89
      %p91 = scmp.eq.s32.totalorder %s21, 0
      %p92 = por %p90, %p91
      %s93 = ssub.s32 %s22, %s41
      %p94 = scmp.eq.s32.totalorder %s93, 0
      %s96 = sadd.s32 %s95, 1
      %s97 = scalar_select %p94, %s95, %s96
      %p100 = pneg %p94
      %p101 = scmp.eq.s32.totalorder %s15, 11
      %p102 = por %p100, %p101
      %p103 = scmp.ne.s32.totalorder %s95, %s98
      %p104 = scmp.eq.s32.totalorder %s15, 0
      %p105 = por %p103, %p104
      %p106 = scmp.ne.s32.totalorder %s95, %s98
      %p107 = scmp.eq.s32.totalorder %s20, 11
      %p108 = por %p106, %p107
      %p109 = scmp.ne.s32.totalorder %s98, %s99
      %p110 = scmp.eq.s32.totalorder %s20, 0
      %p111 = por %p109, %p110
      %p112 = scmp.ne.s32.totalorder %s98, %s99
      %p113 = scmp.eq.s32.totalorder %s21, 11
      %p114 = por %p112, %p113
      %p116 = scmp.ne.s32.totalorder %s99, %s115
      %p117 = scmp.eq.s32.totalorder %s21, 0
      %p118 = por %p116, %p117
      %p119 = scmp.le.s32.totalorder 1, %s15
      %p120 = scmp.lt.s32.totalorder %s15, 13
      %p121 = pnand %p119, %p120
      %p122 = pneg %p121
      // Predicated region
      $region9: #{tpu_custom_call.1} parent=5 // pred_check
        _
      $region10: #{tpu_custom_call.1} parent=5 // pred_check_branch
        %124 = sbr.rel (%p121) target = $region12
      $region11: #{tpu_custom_call.1} parent=5 // pred_region
        %s125 = ssub.s32 %s15, 1
        // Predicated region
        $region13: #{tpu_custom_call.1} parent=11 // pred_check
          %p126 = pneg %p55
        $region14: #{tpu_custom_call.1} parent=11 // pred_check_branch
          %128 = sbr.rel (%p126) target = $region16
        $region15: #{tpu_custom_call.1} parent=11 // pred_region
          %s130 = ssub.s32 128, 128
          %131 = vsyncadd [#allocation5], %s130
          %s133 = sshll.u32 [#allocation4], 4
          %s134 = int_to_ptr.vmem [resolvable:$true] %s133
          %136 = dma.hbm_to_vmem [thread:$0]  %s0, 128, %s134, [#allocation5]
        $region16: #{tpu_custom_call.1} parent=11 // pred_fallthru
          _
      $region12: #{tpu_custom_call.1} parent=5 // pred_fallthru
        _
      %p137 = scmp.lt.s32.totalorder %s15, 12
      // Predicated region
      $region17: #{tpu_custom_call.1} parent=5 // pred_check
        %p138 = pneg %p137
      $region18: #{tpu_custom_call.1} parent=5 // pred_check_branch
        %140 = sbr.rel (%p138) target = $region20
      $region19: #{tpu_custom_call.1} parent=5 // pred_region
        // Predicated region
        $region21: #{tpu_custom_call.1} parent=19 // pred_check
          %p141 = pneg %p79
        $region22: #{tpu_custom_call.1} parent=19 // pred_check_branch
          %143 = sbr.rel (%p141) target = $region24
        $region23: #{tpu_custom_call.1} parent=19 // pred_region
          %s144 = sand.u32 %s69, 1
          %s145 = scalar_lea.sflag [#allocation8], %s144
          %s146 = sand.u32 %s69, 1
          %s147 = smul.addr %s146, 128
          %s148 = scalar_lea.vmem [#allocation7], %s147
          %s150 = ssub.s32 2048, 2048
          %151 = vsyncadd %s145, %s150
          %s152 = smul.addr %s23, 64
          %s153 = sadd.s32 %s24, %s152
          %s154 = smul.addr %s22, 128
          %s155 = sadd.s32 %s153, %s154
          %s156 = smul.addr %s155, 64
          %s157 = scalar_lea.hbm %s1, %s156
          %s158 = sshll.u32 %s148, 4
          %s159 = int_to_ptr.vmem [resolvable:$true] %s158
          %164 = dma.hbm_to_vmem [thread:$0]  %s157, 2048, %s159, %s145, 128, 64, 4
        $region24: #{tpu_custom_call.1} parent=19 // pred_fallthru
          _
      $region20: #{tpu_custom_call.1} parent=5 // pred_fallthru
        _
      %p165 = scmp.le.s32.totalorder 1, %s15
      %p166 = scmp.lt.s32.totalorder %s15, 13
      %p167 = pnand %p165, %p166
      %p168 = pneg %p167
      // Predicated region
      $region25: #{tpu_custom_call.1} parent=5 // pred_check
        _
      $region26: #{tpu_custom_call.1} parent=5 // pred_check_branch
        %170 = sbr.rel (%p167) target = $region28
      $region27: #{tpu_custom_call.1} parent=5 // pred_region
        %s171 = ssub.s32 %s15, 1
        // Predicated region
        $region29: #{tpu_custom_call.1} parent=27 // pred_check
          %p172 = pneg %p55
        $region30: #{tpu_custom_call.1} parent=27 // pred_check_branch
          %174 = sbr.rel (%p172) target = $region32
        $region31: #{tpu_custom_call.1} parent=27 // pred_region
          %175 = dma.done [#allocation5], 128
        $region32: #{tpu_custom_call.1} parent=27 // pred_fallthru
          _
        %s176 = sand.u32 %s72, 1
        %s177 = scalar_lea.sflag [#allocation8], %s176
        %s178 = sand.u32 %s72, 1
        %s179 = smul.addr %s178, 128
        %s180 = scalar_lea.vmem [#allocation7], %s179
        // Predicated region
        $region33: #{tpu_custom_call.1} parent=27 // pred_check
          %p181 = pneg %p85
        $region34: #{tpu_custom_call.1} parent=27 // pred_check_branch
          %183 = sbr.rel (%p181) target = $region36
        $region35: #{tpu_custom_call.1} parent=27 // pred_region
          %184 = dma.done %s177, 2048
        $region36: #{tpu_custom_call.1} parent=27 // pred_fallthru
          _
        %p185 = pneg %p55
        %p186 = pneg %p52
        %s187 = sand.u32 %s72, 1
        %s188 = scalar_lea.sflag [#allocation8], %s187
        %s189 = sand.u32 %s72, 1
        %s190 = smul.addr %s189, 128
        %s191 = scalar_lea.vmem [#allocation7], %s190
        %p192 = pneg %p85
        %p193 = pneg %p82
        %p194 = pneg %p111
        %p195 = pneg %p108
        %s196 = sand.u32 %s98, 1
        %s197 = scalar_lea.sflag [#allocation6], %s196
        %s198 = sand.u32 %s98, 1
        %s199 = smul.addr %s198, 8
        %s200 = scalar_lea.vmem [#allocation9], %s199
        %p202 = scmp.eq.s32.totalorder %s26, 0
        %p203 = scmp.eq.s32.totalorder %s27, 0
        %p204 = pnand %p202, %p203
        %p205 = pneg %p204
        // Predicated region
        $region37: #{tpu_custom_call.1} parent=27 // pred_check
          _
        $region38: #{tpu_custom_call.1} parent=27 // pred_check_branch
          %207 = sbr.rel (%p204) target = $region40
        $region39: #{tpu_custom_call.1} parent=27 // pred_region
          %v208 = vld [vmem:[#allocation4] sm:$0xff]
          %v209 = vunpack.c.l.bf16 %v208
          %v210 = vunpack.c.h.bf16 %v208
          %211 = vst [vmem:[#allocation2] sm:$0xff] %v209
          %212 = vst [vmem:[#allocation2 + $0x8] sm:$0xff] %v210
        $region40: #{tpu_custom_call.1} parent=27 // pred_fallthru
          _
        %s213 = smul.u32 %s27, 128
        %v214 = vld [vmem:[#allocation2] sm:$0xff]
        %v215 = vld [vmem:[#allocation2 + $0x8] sm:$0xff]
        %v216 = vpack.c.bf16 %v214, %v214
        %v217 = vpack.c.bf16 %v215, %v215
        %v218 = vld [vmem:[%s180] sm:$0xf]
        %v219 = vld [vmem:[%s180 + $0x4] sm:$0xf]
        %v220 = vld [vmem:[%s180 + $0x8] sm:$0xf]
        %v221 = vld [vmem:[%s180 + $0xc] sm:$0xf]
        %v222 = vld [vmem:[%s180 + $0x10] sm:$0xf]
        %v223 = vld [vmem:[%s180 + $0x14] sm:$0xf]
        %v224 = vld [vmem:[%s180 + $0x18] sm:$0xf]
        %v225 = vld [vmem:[%s180 + $0x1c] sm:$0xf]
        %v226 = vld [vmem:[%s180 + $0x20] sm:$0xf]
        %v227 = vld [vmem:[%s180 + $0x24] sm:$0xf]
        %v228 = vld [vmem:[%s180 + $0x28] sm:$0xf]
        %v229 = vld [vmem:[%s180 + $0x2c] sm:$0xf]
        %v230 = vld [vmem:[%s180 + $0x30] sm:$0xf]
        %v231 = vld [vmem:[%s180 + $0x34] sm:$0xf]
        %v232 = vld [vmem:[%s180 + $0x38] sm:$0xf]
        %v233 = vld [vmem:[%s180 + $0x3c] sm:$0xf]
        %v234 = vld [vmem:[%s180 + $0x40] sm:$0xf]
        %v235 = vld [vmem:[%s180 + $0x44] sm:$0xf]
        %v236 = vld [vmem:[%s180 + $0x48] sm:$0xf]
        %v237 = vld [vmem:[%s180 + $0x4c] sm:$0xf]
        %v238 = vld [vmem:[%s180 + $0x50] sm:$0xf]
        %v239 = vld [vmem:[%s180 + $0x54] sm:$0xf]
        %v240 = vld [vmem:[%s180 + $0x58] sm:$0xf]
        %v241 = vld [vmem:[%s180 + $0x5c] sm:$0xf]
        %v242 = vld [vmem:[%s180 + $0x60] sm:$0xf]
        %v243 = vld [vmem:[%s180 + $0x64] sm:$0xf]
        %v244 = vld [vmem:[%s180 + $0x68] sm:$0xf]
        %v245 = vld [vmem:[%s180 + $0x6c] sm:$0xf]
        %v246 = vld [vmem:[%s180 + $0x70] sm:$0xf]
        %v247 = vld [vmem:[%s180 + $0x74] sm:$0xf]
        %v248 = vld [vmem:[%s180 + $0x78] sm:$0xf]
        %v249 = vld [vmem:[%s180 + $0x7c] sm:$0xf]
        %v282 = vunpack.c.l.b16 %v218
        %v283 = vunpack.c.l.b16 %v219
        %v284 = vunpack.c.l.b16 %v220
        %v285 = vunpack.c.l.b16 %v221
        %v286 = vunpack.c.l.b16 %v222
        %v287 = vunpack.c.l.b16 %v223
        %v288 = vunpack.c.l.b16 %v224
        %v289 = vunpack.c.l.b16 %v225
        %v290 = vunpack.c.l.b16 %v226
        %v291 = vunpack.c.l.b16 %v227
        %v292 = vunpack.c.l.b16 %v228
        %v293 = vunpack.c.l.b16 %v229
        %v294 = vunpack.c.l.b16 %v230
        %v295 = vunpack.c.l.b16 %v231
        %v296 = vunpack.c.l.b16 %v232
        %v297 = vunpack.c.l.b16 %v233
        %v298 = vunpack.c.l.b16 %v234
        %v299 = vunpack.c.l.b16 %v235
        %v300 = vunpack.c.l.b16 %v236
        %v301 = vunpack.c.l.b16 %v237
        %v302 = vunpack.c.l.b16 %v238
        %v303 = vunpack.c.l.b16 %v239
        %v304 = vunpack.c.l.b16 %v240
        %v305 = vunpack.c.l.b16 %v241
        %v306 = vunpack.c.l.b16 %v242
        %v307 = vunpack.c.l.b16 %v243
        %v308 = vunpack.c.l.b16 %v244
        %v309 = vunpack.c.l.b16 %v245
        %v310 = vunpack.c.l.b16 %v246
        %v311 = vunpack.c.l.b16 %v247
        %v312 = vunpack.c.l.b16 %v248
        %v313 = vunpack.c.l.b16 %v249
        %v314 = vpack.c.b16 %v283, %v282
        %v315 = vpack.c.b16 %v285, %v284
        %v316 = vpack.c.b16 %v287, %v286
        %v317 = vpack.c.b16 %v289, %v288
        %v318 = vpack.c.b16 %v291, %v290
        %v319 = vpack.c.b16 %v293, %v292
        %v320 = vpack.c.b16 %v295, %v294
        %v321 = vpack.c.b16 %v297, %v296
        %v322 = vpack.c.b16 %v299, %v298
        %v323 = vpack.c.b16 %v301, %v300
        %v324 = vpack.c.b16 %v303, %v302
        %v325 = vpack.c.b16 %v305, %v304
        %v326 = vpack.c.b16 %v307, %v306
        %v327 = vpack.c.b16 %v309, %v308
        %v328 = vpack.c.b16 %v311, %v310
        %v329 = vpack.c.b16 %v313, %v312
        %346 = vmatprep.subr.bf16.mxu0 0
        %347 = vmatpush1.bf16.msra.mxu0 %v321
        %348 = vmatprep.subr.bf16.mxu0 0
        %349 = vmatpush1.bf16.msra.mxu0 %v320
        %350 = vmatprep.subr.bf16.mxu0 0
        %351 = vmatpush1.bf16.msra.mxu0 %v319
        %352 = vmatprep.subr.bf16.mxu0 0
        %353 = vmatpush1.bf16.msra.mxu0 %v318
        %354 = vmatprep.subr.bf16.mxu0 0
        %355 = vmatpush1.bf16.msra.mxu0 %v317
        %356 = vmatprep.subr.bf16.mxu0 0
        %357 = vmatpush1.bf16.msra.mxu0 %v316
        %358 = vmatprep.subr.bf16.mxu0 0
        %359 = vmatpush1.bf16.msra.mxu0 %v315
        %360 = vmatprep.subr.bf16.mxu0 0
        %361 = vmatpush1.bf16.msra.mxu0 %v314
        %362 = vmatprep.subr.bf16.mxu0 0
        %363 = vmatpush2.bf16.msra.mxu0 %v329
        %364 = vmatprep.subr.bf16.mxu0 0
        %365 = vmatpush2.bf16.msra.mxu0 %v328
        %366 = vmatprep.subr.bf16.mxu0 0
        %367 = vmatpush2.bf16.msra.mxu0 %v327
        %368 = vmatprep.subr.bf16.mxu0 0
        %369 = vmatpush2.bf16.msra.mxu0 %v326
        %370 = vmatprep.subr.bf16.mxu0 0
        %371 = vmatpush2.bf16.msra.mxu0 %v325
        %372 = vmatprep.subr.bf16.mxu0 0
        %373 = vmatpush2.bf16.msra.mxu0 %v324
        %374 = vmatprep.subr.bf16.mxu0 0
        %375 = vmatpush2.bf16.msra.mxu0 %v323
        %376 = vmatprep.subr.bf16.mxu0 0
        %377 = vmatpush2.bf16.msra.mxu0 %v322
        %378 = vmatprep.mubr.bf16.mxu0 %v217
        %379 = vmatmul.mubr.bf16.gmra.mxu0 %v216
        %v380 = vpop.f32.mrf.mxu0
        %v381 = vadd.f32 0.0, %v380
        %v382 = vpop.f32.mrf.mxu0
        %v383 = vpop.f32.mrf.mxu0
        %v384 = vpop.f32.mrf.mxu0
        %385 = vdwg.mxu0
        %s386 = sshra.s32 %s213, 7
        %s387 = sand.u32 %s213, 127
        %s388 = smul.addr %s386, 8
        %s389 = scalar_lea.vmem [#allocation3], %s388
        %390 = vst [vmem:[%s389] sm:$0xff] %v381
        %p391 = scmp.eq.s32.totalorder %s27, 1
        // Predicated region
        $region41: #{tpu_custom_call.1} parent=27 // pred_check
          %p392 = pneg %p391
        $region42: #{tpu_custom_call.1} parent=27 // pred_check_branch
          %394 = sbr.rel (%p392) target = $region44
        $region43: #{tpu_custom_call.1} parent=27 // pred_region
          %v395 = vld [vmem:[#allocation3] sm:$0xff]
          %v396 = vld [vmem:[#allocation3 + $0x8] sm:$0xff]
          %v397 = vld [vmem:[#allocation2] sm:$0xff]
          %v398 = vld [vmem:[#allocation2 + $0x8] sm:$0xff]
          %v399 = vxor.u32 %v395, 2147483648
          %v400 = vxor.u32 %v396, 2147483648
          %v401 = vmul.f32 %v399, 1.442695
          %v402 = vpow.pop %v401
          %v403 = vmul.f32 %v400, 1.442695
          %v404 = vpow.pop %v403
          %v405 = vadd.f32 %v402, 1.0
          %v406 = vadd.f32 %v404, 1.0
          %v407 = vrcp.pop %v405
          %v408 = vmul.f32 1.0, %v407
          %v409 = vrcp.pop %v406
          %v410 = vmul.f32 1.0, %v409
          %v411 = vmul.f32 %v395, %v408
          %v412 = vmul.f32 %v396, %v410
          %v413 = vadd.f32 %v397, %v411
          %v414 = vadd.f32 %v398, %v412
          %415 = vst [vmem:[#allocation2] sm:$0xff] %v413
          %416 = vst [vmem:[#allocation2 + $0x8] sm:$0xff] %v414
        $region44: #{tpu_custom_call.1} parent=27 // pred_fallthru
          _
        %v417 = vld [vmem:[#allocation2] sm:$0xff]
        %v418 = vld [vmem:[#allocation2 + $0x8] sm:$0xff]
        %v419 = vpack.c.bf16 %v417, %v417
        %v420 = vpack.c.bf16 %v418, %v418
        %v423 = vunpack.c.l.b16 %v419
        %v424 = vunpack.c.l.b16 %v420
        %v425 = vpack.c.b16 %v424, %v423
        %427 = vst [vmem:[%s200] sm:$0xff] %v425
        %s428 = sand.u32 %s98, 1
        %s429 = scalar_lea.sflag [#allocation6], %s428
        %s430 = sand.u32 %s98, 1
        %s431 = smul.addr %s430, 8
        %s432 = scalar_lea.vmem [#allocation9], %s431
        // Predicated region
        $region45: #{tpu_custom_call.1} parent=27 // pred_check
          %p433 = pneg %p108
        $region46: #{tpu_custom_call.1} parent=27 // pred_check_branch
          %435 = sbr.rel (%p433) target = $region48
        $region47: #{tpu_custom_call.1} parent=27 // pred_region
          %s437 = ssub.s32 128, 128
          %438 = vsyncadd %s429, %s437
          %s439 = smul.addr %s25, 2
          %s440 = smul.addr %s439, 64
          %s441 = scalar_lea.hbm %s2, %s440
          %s443 = sshll.u32 %s432, 4
          %s444 = int_to_ptr.vmem [resolvable:$true] %s443
          %446 = dma.vmem_to_hbm [thread:$0]  %s444, 128, %s441, %s429
        $region48: #{tpu_custom_call.1} parent=27 // pred_fallthru
          _
      $region28: #{tpu_custom_call.1} parent=5 // pred_fallthru
        _
      %p447 = scmp.le.s32.totalorder 2, %s15
      // Predicated region
      $region49: #{tpu_custom_call.1} parent=5 // pred_check
        %p448 = pneg %p447
      $region50: #{tpu_custom_call.1} parent=5 // pred_check_branch
        %450 = sbr.rel (%p448) target = $region52
      $region51: #{tpu_custom_call.1} parent=5 // pred_region
        %s451 = ssub.s32 %s15, 2
        // Predicated region
        $region53: #{tpu_custom_call.1} parent=51 // pred_check
          %p452 = pneg %p114
        $region54: #{tpu_custom_call.1} parent=51 // pred_check_branch
          %454 = sbr.rel (%p452) target = $region56
        $region55: #{tpu_custom_call.1} parent=51 // pred_region
          %s455 = sand.u32 %s99, 1
          %s456 = scalar_lea.sflag [#allocation6], %s455
          %s457 = sand.u32 %s99, 1
          %s458 = smul.addr %s457, 8
          %s459 = scalar_lea.vmem [#allocation9], %s458
          %460 = dma.done %s456, 128
        $region56: #{tpu_custom_call.1} parent=51 // pred_fallthru
          _
      $region52: #{tpu_custom_call.1} parent=5 // pred_fallthru
        _
    $region6: #{tpu_custom_call.1} parent=1 // loop_footer
      %s19 = sadd.s32 1, %s15
    $region7: #{tpu_custom_call.1} parent=1 // loop_footer_branch
      %14 = sbr.rel target = $region3
    $region8: #{tpu_custom_call.1} parent=1 // loop_exit
      _
    %461 = vsyncpa [#allocation5], 1
    %s462 = scalar_lea.sflag [#allocation5], 1
    %463 = vsyncpa %s462, 1
    %464 = vsyncpa [#allocation8], 1
    %s465 = scalar_lea.sflag [#allocation8], 1
    %466 = vsyncpa %s465, 1
    %467 = vsyncpa [#allocation6], 1
    %s468 = scalar_lea.sflag [#allocation6], 1
    %469 = vsyncpa %s468, 1

</llo_original>
